<compile_context>
chip_gen: v6e
topology: v6e:2x2x1
jax: 0.10.0
libtpu: 0.0.40
codegen_flags: <defaults>
</compile_context>

<pallas_src>
import functools

import jax
import jax.numpy as jnp
from jax.experimental import pallas as pl
from jax.experimental.pallas import tpu as pltpu


def _sp_conv1d_kernel(x_ref, w_ref, o_ref, xp_ref, *, L, K, pad):
    """Same-padding 1-D cross-correlation, 1->1 channel, K taps, no bias.

    x_ref : (NB, L)           input rows (lane axis = conv axis)
    w_ref : (K,)              conv taps in SMEM (scalar reads)
    o_ref : (NB, L)           output rows
    xp_ref: (NB, L + 2*pad)   VMEM scratch holding the zero-haloed rows
    """
    x = x_ref[...].astype(jnp.float32)                 # (NB, L) in registers

    # Build the zero halo in VMEM instead of a wrapper-side jnp.pad HBM round-trip.
    # A single full-width zero store is cheaper/simpler than two masked 2-lane stores
    # and keeps every grid step self-contained (safe under megacore sharding).
    xp_ref[...] = jnp.zeros_like(xp_ref)
    xp_ref[:, pad:pad + L] = x

    # out[:, i] = sum_k xp[:, i + k] * w[k]   (cross-correlation, same padding)
    # Center tap straight from registers; remaining taps are shifted slab loads.
    acc = x * w_ref[pad]
    for k in range(K):
        if k == pad:
            continue
        acc = acc + xp_ref[:, k:k + L] * w_ref[k]

    o_ref[...] = acc.astype(o_ref.dtype)


def _pick_block_rows(n, max_rows=512):
    """Rows per grid step. Whole array if small (block == full dim is always legal);
    otherwise a fixed multiple-of-8 tile, with a ragged (masked) last block."""
    if n <= max_rows:
        return n
    return max_rows  # multiple of 8 -> legal sublane block; Pallas masks the tail


def sp_conv1d(x, weight, *, max_block_rows=512):
    """x: (N, 1, L); weight: (1, 1, K) with K odd. Same-padding Conv1d, no bias.

    Returns (N, 1, L).
    """
    N, cin, L = x.shape
    assert cin == 1, "sp_branch operates on a single-channel 1-D descriptor"
    K = weight.shape[-1]
    assert K % 2 == 1, "kernel size must be odd for same padding"
    pad = K // 2

    x2d = x.reshape(N, L)                               # free squeeze of channel dim
    w_flat = weight.reshape(-1).astype(jnp.float32)     # (K,) -> SMEM scalars

    NB = _pick_block_rows(N, max_block_rows)
    grid = (pl.cdiv(N, NB),)

    kernel = functools.partial(_sp_conv1d_kernel, L=L, K=K, pad=pad)

    out2d = pl.pallas_call(
        kernel,
        out_shape=jax.ShapeDtypeStruct((N, L), x.dtype),
        grid=grid,
        in_specs=[
            pl.BlockSpec((NB, L), lambda i: (i, 0)),
            pl.BlockSpec(memory_space=pltpu.MemorySpace.SMEM),
        ],
        out_specs=pl.BlockSpec((NB, L), lambda i: (i, 0)),
        scratch_shapes=[pltpu.VMEM((NB, L + 2 * pad), jnp.float32)],
        compiler_params=pltpu.CompilerParams(dimension_semantics=("parallel",)),
    )(x2d, w_flat)

    return out2d.reshape(N, 1, L)


@jax.jit
def sp_branch_forward(x, w3, w5):
    """Training-mode forward: conv1d(x, w3, pad=1) + conv1d(x, w5, pad=2).

    Implemented through the module's exact weight-space re-parameterization
    (get_equivalent_kernel_bias): a single 5-tap conv with w_eq = pad(w3,[1,1]) + w5.
    """
    w_eq = jnp.pad(w3, ((0, 0), (0, 0), (1, 1))) + w5
    return sp_conv1d(x, w_eq)


@jax.jit
def sp_branch_forward_deploy(x, w_reparam):
    """Deploy-mode forward: single re-parameterized 5-tap conv."""
    return sp_conv1d(x, w_reparam)


# -------------------- pure-JAX reference (independent of the kernel) --------------------

def _conv1d_ref(x, w, pad):
    x4 = x[:, :, None, :]                               # (N, 1, 1, L)
    w4 = w[:, :, None, :]                               # (1, 1, 1, K)
    y = jax.lax.conv_general_dilated(
        x4, w4, window_strides=(1, 1),
        padding=[(0, 0), (pad, pad)],
        dimension_numbers=("NCHW", "OIHW", "NCHW"))
    return y[:, :, 0, :]


def _reference(x, w3, w5):
    return _conv1d_ref(x, w3, 1) + _conv1d_ref(x, w5, 2)


if __name__ == "__main__":
    key = jax.random.PRNGKey(0)
    kx, k3, k5 = jax.random.split(key, 3)

    N, L = 2, 32                                        # x: (batch, 1, channel)
    x = jax.random.normal(kx, (N, 1, L), dtype=jnp.float32)

    # PyTorch Conv1d default init: U(-1/sqrt(fan_in), 1/sqrt(fan_in)), fan_in = 1 * K
    w3 = jax.random.uniform(k3, (1, 1, 3), minval=-(3 ** -0.5), maxval=3 ** -0.5,
                            dtype=jnp.float32)
    w5 = jax.random.uniform(k5, (1, 1, 5), minval=-(5 ** -0.5), maxval=5 ** -0.5,
                            dtype=jnp.float32)

    out = sp_branch_forward(x, w3, w5)
    out = jax.block_until_ready(out)

    ref = _reference(x, w3, w5)
    assert out.shape == (N, 1, L)
    assert jnp.allclose(out, ref, atol=1e-5, rtol=1e-5), "training-mode mismatch vs reference"

    # deploy-mode path (single re-parameterized conv) must produce the same result
    w_eq = jnp.pad(w3, ((0, 0), (0, 0), (1, 1))) + w5
    out_d = jax.block_until_ready(sp_branch_forward_deploy(x, w_eq))
    assert jnp.allclose(out_d, ref, atol=1e-5, rtol=1e-5), "deploy-mode mismatch vs reference"

    print("KERNEL_OK")
</pallas_src>

<mosaic_0001>
module attributes {stable_mosaic.version = 11 : i64} {
  func.func @_sp_conv1d_kernel(%arg0: i32, %arg1: memref<2x32xf32, #tpu.memory_space<vmem>>, %arg2: memref<5xf32, #tpu.memory_space<smem>>, %arg3: memref<2x32xf32, #tpu.memory_space<vmem>>, %arg4: memref<2x36xf32, #tpu.memory_space<vmem>>) attributes {dimension_semantics = [#tpu.dimension_semantics<parallel>], iteration_bounds = array<i64: 1>, scalar_prefetch = 0 : i64, scratch_operands = 1 : i64, tpu.core_type = #tpu.core_type<tc>, window_params = [{transform_indices = @transform_0, window_bounds = array<i64: 2, 32>}, {transform_indices = @transform_1, window_bounds = array<i64: 5>}, {transform_indices = @transform_2, window_bounds = array<i64: 2, 32>}]} {
    %c0 = arith.constant 0 : index
    %c0_0 = arith.constant 0 : index
    %0 = vector.load %arg1[%c0, %c0_0] : memref<2x32xf32, #tpu.memory_space<vmem>>, vector<2x32xf32>
    %cst = arith.constant 0.000000e+00 : f32
    %1 = vector.broadcast %cst : f32 to vector<2x36xf32>
    %c0_1 = arith.constant 0 : index
    %c0_2 = arith.constant 0 : index
    %2 = vector.load %arg4[%c0_1, %c0_2] : memref<2x36xf32, #tpu.memory_space<vmem>>, vector<2x36xf32>
    tpu.vector_store %arg4[%c0_1, %c0_2], %1 {strides = array<i32>} : memref<2x36xf32, #tpu.memory_space<vmem>>, vector<2x36xf32>,
    %c0_3 = arith.constant 0 : index
    %c2 = arith.constant 2 : index
    %3 = vector.load %arg4[%c0_3, %c2] : memref<2x36xf32, #tpu.memory_space<vmem>>, vector<2x32xf32>
    tpu.vector_store %arg4[%c0_3, %c2], %0 {strides = array<i32>} : memref<2x36xf32, #tpu.memory_space<vmem>>, vector<2x32xf32>,
    %c2_4 = arith.constant 2 : index
    %4 = memref.load %arg2[%c2_4] : memref<5xf32, #tpu.memory_space<smem>>
    %5 = vector.broadcast %4 : f32 to vector<2x32xf32>
    %6 = arith.mulf %0, %5 : vector<2x32xf32>
    %c0_5 = arith.constant 0 : index
    %c0_6 = arith.constant 0 : index
    %7 = vector.load %arg4[%c0_5, %c0_6] : memref<2x36xf32, #tpu.memory_space<vmem>>, vector<2x32xf32>
    %c0_7 = arith.constant 0 : index
    %8 = memref.load %arg2[%c0_7] : memref<5xf32, #tpu.memory_space<smem>>
    %9 = vector.broadcast %8 : f32 to vector<2x32xf32>
    %10 = arith.mulf %7, %9 : vector<2x32xf32>
    %11 = arith.addf %6, %10 : vector<2x32xf32>
    %c0_8 = arith.constant 0 : index
    %c1 = arith.constant 1 : index
    %12 = vector.load %arg4[%c0_8, %c1] : memref<2x36xf32, #tpu.memory_space<vmem>>, vector<2x32xf32>
    %c1_9 = arith.constant 1 : index
    %13 = memref.load %arg2[%c1_9] : memref<5xf32, #tpu.memory_space<smem>>
    %14 = vector.broadcast %13 : f32 to vector<2x32xf32>
    %15 = arith.mulf %12, %14 : vector<2x32xf32>
    %16 = arith.addf %11, %15 : vector<2x32xf32>
    %c0_10 = arith.constant 0 : index
    %c3 = arith.constant 3 : index
    %17 = vector.load %arg4[%c0_10, %c3] : memref<2x36xf32, #tpu.memory_space<vmem>>, vector<2x32xf32>
    %c3_11 = arith.constant 3 : index
    %18 = memref.load %arg2[%c3_11] : memref<5xf32, #tpu.memory_space<smem>>
    %19 = vector.broadcast %18 : f32 to vector<2x32xf32>
    %20 = arith.mulf %17, %19 : vector<2x32xf32>
    %21 = arith.addf %16, %20 : vector<2x32xf32>
    %c0_12 = arith.constant 0 : index
    %c4 = arith.constant 4 : index
    %22 = vector.load %arg4[%c0_12, %c4] : memref<2x36xf32, #tpu.memory_space<vmem>>, vector<2x32xf32>
    %c4_13 = arith.constant 4 : index
    %23 = memref.load %arg2[%c4_13] : memref<5xf32, #tpu.memory_space<smem>>
    %24 = vector.broadcast %23 : f32 to vector<2x32xf32>
    %25 = arith.mulf %22, %24 : vector<2x32xf32>
    %26 = arith.addf %21, %25 : vector<2x32xf32>
    %c0_14 = arith.constant 0 : index
    %c0_15 = arith.constant 0 : index
    %27 = vector.load %arg3[%c0_14, %c0_15] : memref<2x32xf32, #tpu.memory_space<vmem>>, vector<2x32xf32>
    tpu.vector_store %arg3[%c0_14, %c0_15], %26 {strides = array<i32>} : memref<2x32xf32, #tpu.memory_space<vmem>>, vector<2x32xf32>,
    return
  }
  func.func @transform_0(%arg0: i32) -> (i32, i32) {
    %c0_i32 = arith.constant 0 : i32
    %c0_i32_0 = arith.constant 0 : i32
    return %arg0, %c0_i32 : i32, i32
  }
  func.func @transform_1(%arg0: i32) -> i32 {
    %c0_i32 = arith.constant 0 : i32
    %c0_i32_0 = arith.constant 0 : i32
    return %c0_i32 : i32
  }
  func.func @transform_2(%arg0: i32) -> (i32, i32) {
    %c0_i32 = arith.constant 0 : i32
    %c0_i32_0 = arith.constant 0 : i32
    return %arg0, %c0_i32 : i32, i32
  }
}

</mosaic_0001>

<llo_original>
// kernel: sp_branch_forward.1
$region0: #{sp_branch_forward.1}
  #allocation0 [shape = 'u32[]', space=smem, size = 0x4, offset = 0x4, fixed_abs, tag = 'smem constant byte address 0x4 - core index']
  #allocation1 [shape = 'u32[144,128]{1,0:T(1,128)}', space=vmem, size = 0x12000, scoped, tag = 'internal scratch']
  #allocation2 [shape = 'f32[2,36]{1,0:T(2,128)}', space=vmem, size = 0x400, scoped, tag = 'scratch operand']
  %s0 = inlined_call_operand.vmem [shape: f32[2,32], index: 0, kind: input, shape index: {}]
  %s1 = inlined_call_operand.vmem [shape: f32[5], index: 1, kind: input, shape index: {}]
  %s2 = inlined_call_operand.hbm [shape: f32[2,32], index: 2, kind: output, shape index: {}]
  %s3 = sld [smem:[#allocation0]]
  $region22: #{sp_branch_forward.1} parent=0
    _
  %s5 = ssub.s32 1, %s3
  %s6 = scalar_select 0, %s5, %s3
  $region1: #{sp_branch_forward.1} parent=0
    #allocation3 [shape = 'u8[512]{0}', space=smem, size = 0x200, scoped, tag = 'input window, operand 1, single buffered']
    #allocation4 [shape = 's32[1]{0}', space=sflag, size = 0x4, scoped, tag = 'scoped memory for sp_branch_forward.1']
    #allocation5 [shape = 's32[1]{0}', space=sflag, size = 0x4, scoped, tag = 'scoped memory for sp_branch_forward.1']
    #allocation6 [shape = 'u8[1024]{0}', space=vmem, size = 0x400, scoped, tag = 'output window, operand 0, single buffered']
    %7 = vsyncpa [#allocation5], 0
    %8 = vsyncpa [#allocation4], 0
    // Predicated region
    $region2: #{sp_branch_forward.1} parent=1 // pred_check
      _
    $region3: #{sp_branch_forward.1} parent=1 // pred_check_branch
      %10 = sbr.rel (0) target = $region5
    $region4: #{sp_branch_forward.1} parent=1 // pred_region
      _
    $region5: #{sp_branch_forward.1} parent=1 // pred_fallthru
      _
    // Predicated region
    $region6: #{sp_branch_forward.1} parent=1 // pred_check
      _
    $region7: #{sp_branch_forward.1} parent=1 // pred_check_branch
      %12 = sbr.rel (0) target = $region9
    $region8: #{sp_branch_forward.1} parent=1 // pred_region
      %s14 = ssub.s32 16, 16
      %15 = vsyncadd [#allocation5], %s14
      %s17 = sshll.u32 %s1, 4
      %s18 = int_to_ptr.vmem [resolvable:$true] %s17
      %20 = dma.vmem_to_smem %s18, 16, [#allocation3], [#allocation5]
    $region9: #{sp_branch_forward.1} parent=1 // pred_fallthru
      _
    // Predicated region
    $region10: #{sp_branch_forward.1} parent=1 // pred_check
      _
    $region11: #{sp_branch_forward.1} parent=1 // pred_check_branch
      %22 = sbr.rel (0) target = $region13
    $region12: #{sp_branch_forward.1} parent=1 // pred_region
      %23 = dma.done [#allocation5], 16
    $region13: #{sp_branch_forward.1} parent=1 // pred_fallthru
      _
    %24 = sfence
    %v25 = vld [vmem:[%s0] sm:$0x3]
    %vm26 = vcmask 287744
    %27 = vst.msk [vmem:[#allocation2] sm:$0x3] %vm26, 0.0
    %29 = vrot.lane.b32.xlu0 %v25, 2
    %v30 = vpop.permute.xlu0 %29
    %vm32 = vcmask 271376
    %33 = vst.msk [vmem:[#allocation2] sm:$0x3] %vm32, %v30
    %s34 = sld [smem:[#allocation3 + $0x2]]
    %v35 = vstv %s34
    %v36 = vmul.f32 %v25, %v35
    %v37 = vld [vmem:[#allocation2] sm:$0x3]
    %s38 = sld [smem:[#allocation3]]
    %v39 = vstv %s38
    %v40 = vmul.f32 %v37, %v39
    %v41 = vadd.f32 %v36, %v40
    %s42 = sld [smem:[#allocation3 + $0x1]]
    %v43 = vstv %s42
    %v44 = vmul.f32 %v37, %v43
    %46 = vrot.lane.b32.xlu0 %v44, 127
    %v47 = vpop.permute.xlu0 %46
    %v49 = vadd.f32 %v41, %v47
    %s50 = sld [smem:[#allocation3 + $0x3]]
    %v51 = vstv %s50
    %v52 = vmul.f32 %v37, %v51
    %54 = vrot.lane.b32.xlu0 %v52, 125
    %v55 = vpop.permute.xlu0 %54
    %v57 = vadd.f32 %v49, %v55
    %s58 = sld [smem:[#allocation3 + $0x4]]
    %v59 = vstv %s58
    %v60 = vmul.f32 %v37, %v59
    %62 = vrot.lane.b32.xlu0 %v60, 124
    %v63 = vpop.permute.xlu0 %62
    %v65 = vadd.f32 %v57, %v63
    %vm66 = vcmask 254976
    %67 = vst.msk [vmem:[#allocation6] sm:$0x3] %vm66, %v65
    // Predicated region
    $region14: #{sp_branch_forward.1} parent=1 // pred_check
      _
    $region15: #{sp_branch_forward.1} parent=1 // pred_check_branch
      %69 = sbr.rel (0) target = $region17
    $region16: #{sp_branch_forward.1} parent=1 // pred_region
      %s71 = ssub.s32 32, 32
      %72 = vsyncadd [#allocation4], %s71
      %s74 = sshll.u32 [#allocation6], 4
      %s75 = int_to_ptr.vmem [resolvable:$true] %s74
      %77 = dma.vmem_to_hbm [thread:$0]  %s75, 32, %s2, [#allocation4]
    $region17: #{sp_branch_forward.1} parent=1 // pred_fallthru
      _
    // Predicated region
    $region18: #{sp_branch_forward.1} parent=1 // pred_check
      _
    $region19: #{sp_branch_forward.1} parent=1 // pred_check_branch
      %79 = sbr.rel (0) target = $region21
    $region20: #{sp_branch_forward.1} parent=1 // pred_region
      %80 = dma.done [#allocation4], 32
    $region21: #{sp_branch_forward.1} parent=1 // pred_fallthru
      _
    %81 = vsyncpa [#allocation4], 1
    %82 = vsyncpa [#allocation5], 1

</llo_original>
